<compile_context>
chip_gen: v5e
topology: v5e:2x2
jax: 0.10.0
libtpu: 0.0.40
codegen_flags: <defaults>
</compile_context>

<pallas_src>
import jax
import jax.numpy as jnp
import numpy as np
from jax.experimental import pallas as pl
from jax.experimental.pallas import tpu as pltpu

VOCAB_SIZE = 2
SEQ_LENGTH = 8


def _perfect_memory_kernel(tgt_ref, out_ref):
    """tgt_ref: (1, TN) int32 flattened next-token targets for this tile.
    out_ref: (V, TN) float32; out_ref[k, n] = +10 if tgt[n] == k else -10.

    V is tiny & static, so do V full-lane-width compares/selects/stores
    (no rank-3 iota, no masked narrow stores along a vocab lane axis)."""
    tgt = tgt_ref[...]                                   # (1, TN) int32
    num_vocab = out_ref.shape[0]
    pos = jnp.float32(10.0)
    neg = jnp.float32(-10.0)
    for k in range(num_vocab):                           # static unrolled (V=2)
        out_ref[pl.ds(k, 1), :] = jnp.where(tgt == k, pos, neg)


def _pick_lane_tile(n):
    """Largest lane-dense tile (multiple of 128) dividing n, capped so the
    double-buffered in/out blocks stay well inside v7x's 64 MiB VMEM."""
    for t in (128 * 1024, 64 * 1024, 32 * 1024, 16 * 1024, 8 * 1024,
              4096, 2048, 1024, 512, 256, 128):
        if n % t == 0:
            return t
    return n  # tiny / irregular problem: single grid step over the whole row


def perfect_memory_forward(x, vocab_size=VOCAB_SIZE):
    """Forward pass of SimplePerfectMemoryModel via a Pallas TPU kernel."""
    B, S = x.shape
    x = x.astype(jnp.int32)

    # Whole-row next-token shift: target[i, j] = x[i, j+1] (j < S-1), else 0.
    # Kept outside the kernel so grid tiling over the flattened axis never
    # needs cross-block neighbours; it fuses into the same jit'd executable.
    target = jnp.concatenate([x[:, 1:], jnp.zeros((B, 1), jnp.int32)], axis=1)

    n = B * S
    target_flat = target.reshape(1, n)                   # lane axis = B*S
    tile = _pick_lane_tile(n)
    grid = (n // tile,)

    out_flat = pl.pallas_call(
        _perfect_memory_kernel,
        out_shape=jax.ShapeDtypeStruct((vocab_size, n), jnp.float32),
        grid_spec=pltpu.PrefetchScalarGridSpec(
            num_scalar_prefetch=0,
            grid=grid,
            in_specs=[pl.BlockSpec((1, tile), lambda i: (0, i))],
            out_specs=pl.BlockSpec((vocab_size, tile), lambda i: (0, i)),
        ),
        compiler_params=pltpu.CompilerParams(
            dimension_semantics=("parallel",)),
    )(target_flat)

    # Layout plumbing back to (B, S, V): out_flat[k, i*S + j] -> out[i, j, k].
    return out_flat.T.reshape(B, S, vocab_size)


def _reference_forward(x_np, vocab_size=VOCAB_SIZE):
    """Pure-numpy re-implementation of the PyTorch loop, for verification."""
    B, S = x_np.shape
    out = np.zeros((B, S, vocab_size), dtype=np.float32)
    for i in range(B):
        for j in range(S):
            if j < S - 1:
                nt = int(x_np[i, j + 1])
                for k in range(vocab_size):
                    out[i, j, k] = 10.0 if k == nt else -10.0
            else:
                out[i, j, 0] = 10.0
                for k in range(1, vocab_size):
                    out[i, j, k] = -10.0
    return out


if __name__ == "__main__":
    key = jax.random.PRNGKey(0)
    batch = 2
    x = jax.random.randint(key, (batch, SEQ_LENGTH), 0, VOCAB_SIZE, dtype=jnp.int32)

    # Single compiled executable: shift + pallas_call + layout plumbing.
    fwd = jax.jit(perfect_memory_forward)
    out = jax.block_until_ready(fwd(x))

    ref = _reference_forward(np.asarray(x))
    np.testing.assert_allclose(np.asarray(out), ref, rtol=0, atol=0)

    print("KERNEL_OK")
</pallas_src>

<mosaic_0001>
module attributes {stable_mosaic.version = 11 : i64} {
  func.func @_perfect_memory_kernel(%arg0: i32, %arg1: memref<1x16xi32, #tpu.memory_space<vmem>>, %arg2: memref<2x16xf32, #tpu.memory_space<vmem>>) attributes {dimension_semantics = [#tpu.dimension_semantics<parallel>], iteration_bounds = array<i64: 1>, scalar_prefetch = 0 : i64, scratch_operands = 0 : i64, tpu.core_type = #tpu.core_type<tc>, window_params = [{transform_indices = @transform_0, window_bounds = array<i64: 1, 16>}, {transform_indices = @transform_1, window_bounds = array<i64: 2, 16>}]} {
    %c0 = arith.constant 0 : index
    %c0_0 = arith.constant 0 : index
    %0 = vector.load %arg1[%c0, %c0_0] : memref<1x16xi32, #tpu.memory_space<vmem>>, vector<1x16xi32>
    %c0_i32 = arith.constant 0 : i32
    %1 = vector.broadcast %c0_i32 : i32 to vector<1x16xi32>
    %2 = arith.cmpi eq, %0, %1 : vector<1x16xi32>
    %cst = arith.constant 1.000000e+01 : f32
    %cst_1 = arith.constant -1.000000e+01 : f32
    %3 = vector.broadcast %cst : f32 to vector<1x16xf32>
    %4 = vector.broadcast %cst_1 : f32 to vector<1x16xf32>
    %5 = arith.select %2, %3, %4 : vector<1x16xi1>, vector<1x16xf32>
    %c0_2 = arith.constant 0 : index
    %c0_3 = arith.constant 0 : index
    %6 = vector.load %arg2[%c0_2, %c0_3] : memref<2x16xf32, #tpu.memory_space<vmem>>, vector<1x16xf32>
    tpu.vector_store %arg2[%c0_2, %c0_3], %5 {strides = array<i32>} : memref<2x16xf32, #tpu.memory_space<vmem>>, vector<1x16xf32>,
    %c1_i32 = arith.constant 1 : i32
    %7 = vector.broadcast %c1_i32 : i32 to vector<1x16xi32>
    %8 = arith.cmpi eq, %0, %7 : vector<1x16xi32>
    %cst_4 = arith.constant 1.000000e+01 : f32
    %cst_5 = arith.constant -1.000000e+01 : f32
    %9 = vector.broadcast %cst_4 : f32 to vector<1x16xf32>
    %10 = vector.broadcast %cst_5 : f32 to vector<1x16xf32>
    %11 = arith.select %8, %9, %10 : vector<1x16xi1>, vector<1x16xf32>
    %c1 = arith.constant 1 : index
    %c0_6 = arith.constant 0 : index
    %12 = vector.load %arg2[%c1, %c0_6] : memref<2x16xf32, #tpu.memory_space<vmem>>, vector<1x16xf32>
    tpu.vector_store %arg2[%c1, %c0_6], %11 {strides = array<i32>} : memref<2x16xf32, #tpu.memory_space<vmem>>, vector<1x16xf32>,
    return
  }
  func.func @transform_0(%arg0: i32) -> (i32, i32) {
    %c0_i32 = arith.constant 0 : i32
    %c0_i32_0 = arith.constant 0 : i32
    return %c0_i32, %arg0 : i32, i32
  }
  func.func @transform_1(%arg0: i32) -> (i32, i32) {
    %c0_i32 = arith.constant 0 : i32
    %c0_i32_0 = arith.constant 0 : i32
    return %c0_i32, %arg0 : i32, i32
  }
}

</mosaic_0001>

<llo_original>
// kernel: perfect_memory_forward.1
$region0: #{perfect_memory_forward.1}
  #allocation0 [shape = 'u32[]', space=smem, size = 0x4, offset = 0x4, fixed_abs, tag = 'smem constant byte address 0x4 - core index']
  #allocation1 [shape = 'u32[72,128]{1,0:T(1,128)}', space=vmem, size = 0x9000, scoped, tag = 'internal scratch']
  %s0 = inlined_call_operand.vmem [shape: s32[1,16], index: 0, kind: input, shape index: {}]
  %s1 = inlined_call_operand.vmem [shape: f32[2,16], index: 1, kind: output, shape index: {}]
  %s2 = sld [smem:[#allocation0]]
  $region14: #{perfect_memory_forward.1} parent=0
    _
  %s4 = ssub.s32 1, %s2
  %s5 = scalar_select 0, %s4, %s2
  // Predicated region
  $region2: #{perfect_memory_forward.1} parent=0 // pred_check
    _
  $region3: #{perfect_memory_forward.1} parent=0 // pred_check_branch
    %7 = sbr.rel (0) target = $region5
  $region4: #{perfect_memory_forward.1} parent=0 // pred_region
    _
  $region5: #{perfect_memory_forward.1} parent=0 // pred_fallthru
    _
  %v8 = vld [vmem:[%s0] sm:$0x1]
  %vm9 = vcmp.eq.s32.totalorder %v8, 0
  %v10 = vsel %vm9, 10.0, -10.0
  %vm11 = vcmask 122880
  %12 = vst.msk [vmem:[%s1] sm:$0x1] %vm11, %v10
  %vm13 = vcmp.eq.s32.totalorder %v8, 1
  %v14 = vsel %vm13, 10.0, -10.0
  %15 = vst.msk [vmem:[%s1 + $0x1] sm:$0x1] %vm11, %v14
  // Predicated region
  $region6: #{perfect_memory_forward.1} parent=0 // pred_check
    _
  $region7: #{perfect_memory_forward.1} parent=0 // pred_check_branch
    %17 = sbr.rel (0) target = $region9
  $region8: #{perfect_memory_forward.1} parent=0 // pred_region
    _
  $region9: #{perfect_memory_forward.1} parent=0 // pred_fallthru
    _
  // Predicated region
  $region10: #{perfect_memory_forward.1} parent=0 // pred_check
    _
  $region11: #{perfect_memory_forward.1} parent=0 // pred_check_branch
    %19 = sbr.rel (0) target = $region13
  $region12: #{perfect_memory_forward.1} parent=0 // pred_region
    _
  $region13: #{perfect_memory_forward.1} parent=0 // pred_fallthru
    _

</llo_original>
